<compile_context>
chip_gen: v7x
topology: tpu7x:2x2x1
jax: 0.10.0
libtpu: 0.0.40
codegen_flags: <defaults>
</compile_context>

<pallas_src>
import math

import jax
import jax.numpy as jnp
from jax.experimental import pallas as pl
from jax.experimental.pallas import tpu as pltpu


def _rowsum_kernel(logp_ref, part_ref):
    """Accumulates lane-folded row sums of logp into a resident (tb, 128) slab."""
    j = pl.program_id(1)

    @pl.when(j == 0)
    def _init():
        part_ref[...] = jnp.zeros_like(part_ref)

    tv = logp_ref.shape[1]
    ngroups = tv // 128

    # Per-group ref-view slices (zero-cost), per-group f32 cast, pairwise tree of
    # pure VPU adds.  Live intermediates are a handful of (tb, 128) slabs only.
    slabs = [logp_ref[:, g * 128:(g + 1) * 128].astype(jnp.float32)
             for g in range(ngroups)]
    while len(slabs) > 1:
        nxt = [slabs[i] + slabs[i + 1] for i in range(0, len(slabs) - 1, 2)]
        if len(slabs) % 2:
            nxt.append(slabs[-1])
        slabs = nxt

    part_ref[...] += slabs[0]


def _pick_tiles(B, V, itemsize):
    """Pick (tb, tv) block shape.

    tv: largest multiple-of-128 divisor of V with <= 4096 lanes (robust for real
        vocab sizes such as 32000 -> 3200, 32128 -> 4016, 50304 -> 3144, ...).
    tb: divisor of B, >= dtype-aware sublane minimum, with the input block under
        ~4 MiB (double-buffered ~8 MiB fits every generation incl. v7x's 64 MiB
        VMEM), preferring >= 2 batch tiles so v7x megacore can shard the batch.
    """
    nv = V // 128
    dv = 1
    for d in range(min(nv, 4096 // 128), 0, -1):
        if nv % d == 0:
            dv = d
            break
    tv = 128 * dv

    min_tb = {4: 8, 2: 16, 1: 32}.get(itemsize, 8)
    min_tb = min(min_tb, B)
    block_bytes = 4 * 1024 * 1024

    cands = [t for t in range(min_tb, B + 1, min_tb) if B % t == 0]
    if not cands:
        cands = [B]
    fit = [t for t in cands if t * tv * itemsize <= block_bytes]
    if not fit:
        fit = [min(cands)]          # explicit fallback: smallest legal block
    multi = [t for t in fit if B // t >= 2]
    tb = max(multi) if multi else max(fit)
    return tb, tv


def label_smoothing_loss(output, target, *, label_smoothing, tgt_vocab_size,
                         ignore_index=-100):
    """output: (B, V) float log-probs (any float dtype); target: (B,) ints.
    Returns the scalar KL-div loss (reduction='sum')."""
    B, V = output.shape
    assert V == tgt_vocab_size
    assert B % 8 == 0 and V % 128 == 0, "assumes (8,128)-aligned shapes"
    # TODO(synk): pad/mask ragged B or V that are not (8,128)-aligned.

    smoothing_value = label_smoothing / (tgt_vocab_size - 2)
    confidence = 1.0 - label_smoothing
    # one_hot[ignore_index] = 0 uses Python (possibly negative) indexing.
    ignore_col = ignore_index % tgt_vocab_size

    itemsize = jnp.dtype(output.dtype).itemsize
    tb, tv = _pick_tiles(B, V, itemsize)

    # Kernel output: per-row, lane-folded partial row sums of logp, shape (B, 128).
    parts = pl.pallas_call(
        _rowsum_kernel,
        out_shape=jax.ShapeDtypeStruct((B, 128), jnp.float32),
        grid_spec=pltpu.PrefetchScalarGridSpec(
            num_scalar_prefetch=0,
            grid=(B // tb, V // tv),              # vocab (reduction) axis last
            in_specs=[pl.BlockSpec((tb, tv), lambda i, j: (i, j))],
            # Output block index constant over j -> resident accumulator.
            out_specs=pl.BlockSpec((tb, 128), lambda i, j: (i, 0)),
        ),
        compiler_params=pltpu.CompilerParams(
            dimension_semantics=("parallel", "arbitrary"),
            vmem_limit_bytes=32 * 1024 * 1024),
        cost_estimate=pl.CostEstimate(
            flops=2 * B * V,
            transcendentals=0,
            bytes_accessed=B * V * itemsize + B * 128 * 4),
    )(output)

    row_sum = jnp.sum(parts, axis=1)              # (B,) = sum_c logp[b, c]

    # O(B) wrapper-side corrections (gathers), reusing the already-needed masks.
    target_i32 = target.astype(jnp.int32)
    valid = target_i32 != ignore_index
    tgt_is_icol = target_i32 == ignore_col
    safe_tgt = jnp.where(valid, target_i32, 0)    # keep gather indices in range
    logp_tgt = jnp.take_along_axis(output, safe_tgt[:, None], axis=1)[:, 0]
    logp_tgt = logp_tgt.astype(jnp.float32)
    logp_icol = output[:, ignore_col].astype(jnp.float32)

    cross_rows = (smoothing_value * row_sum
                  + (confidence - smoothing_value) * logp_tgt
                  - jnp.where(tgt_is_icol, 0.0, smoothing_value) * logp_icol)
    cross = jnp.sum(jnp.where(valid, cross_rows, 0.0))   # sum_b sum_c p * logp

    # Entropy term sum(xlogy(p, p)) is a closed form of target counts (O(B) work).
    s_log_s = smoothing_value * math.log(smoothing_value) if smoothing_value > 0 else 0.0
    c_log_c = confidence * math.log(confidence) if confidence > 0 else 0.0
    n_valid = jnp.sum(valid.astype(jnp.float32))
    n_tgt_eq_icol = jnp.sum(jnp.logical_and(valid, tgt_is_icol).astype(jnp.float32))
    entropy = (n_valid * c_log_c
               + ((n_valid - n_tgt_eq_icol) * (V - 2)
                  + n_tgt_eq_icol * (V - 1)) * s_log_s)

    # F.kl_div(output, p, reduction='sum') = sum(xlogy(p, p)) - sum(p * output)
    return entropy - cross


def _reference(output, target, *, label_smoothing, tgt_vocab_size, ignore_index):
    B, V = output.shape
    smoothing_value = label_smoothing / (tgt_vocab_size - 2)
    confidence = 1.0 - label_smoothing
    one_hot = jnp.full((V,), smoothing_value, dtype=jnp.float32)
    one_hot = one_hot.at[ignore_index].set(0.0)
    p = jnp.tile(one_hot[None, :], (B, 1))
    p = p.at[jnp.arange(B), target].set(confidence)
    p = jnp.where((target == ignore_index)[:, None], 0.0, p)
    plogp = jnp.where(p > 0, p * jnp.log(jnp.where(p > 0, p, 1.0)), 0.0)
    return jnp.sum(plogp - p * output.astype(jnp.float32))


if __name__ == "__main__":
    B = 16                 # batch_size
    V = 256                # tgt_vocab_size
    label_smoothing = 0.1

    key = jax.random.PRNGKey(0)
    k_out, k_tgt = jax.random.split(key)

    # Model output = log-probabilities (as expected by F.kl_div).
    logits = jax.random.normal(k_out, (B, V), dtype=jnp.float32)
    output = jax.nn.log_softmax(logits, axis=-1)
    target = jax.random.randint(k_tgt, (B,), 0, V, dtype=jnp.int32)

    # Case 1: non-negative padding index; one row is ignored.
    ignore_index = 2
    tgt1 = target.at[3].set(ignore_index)
    loss1 = jax.block_until_ready(label_smoothing_loss(
        output, tgt1, label_smoothing=label_smoothing,
        tgt_vocab_size=V, ignore_index=ignore_index))
    ref1 = _reference(output, tgt1, label_smoothing=label_smoothing,
                      tgt_vocab_size=V, ignore_index=ignore_index)
    assert jnp.allclose(loss1, ref1, rtol=1e-5, atol=1e-5), (loss1, ref1)

    # Case 2: default negative ignore_index (-100 -> column V-100), including the
    # edge case target == (ignore_index % V).
    ignore_index = -100
    tgt2 = target.at[5].set((-100) % V)
    loss2 = jax.block_until_ready(label_smoothing_loss(
        output, tgt2, label_smoothing=label_smoothing,
        tgt_vocab_size=V, ignore_index=ignore_index))
    ref2 = _reference(output, tgt2, label_smoothing=label_smoothing,
                      tgt_vocab_size=V, ignore_index=ignore_index)
    assert jnp.allclose(loss2, ref2, rtol=1e-5, atol=1e-5), (loss2, ref2)

    print("KERNEL_OK")
</pallas_src>

<mosaic_0001>
module attributes {stable_mosaic.version = 11 : i64} {
  func.func @_rowsum_kernel(%arg0: i32, %arg1: i32, %arg2: memref<8x256xf32, #tpu.memory_space<vmem>>, %arg3: memref<8x128xf32, #tpu.memory_space<vmem>>) attributes {dimension_semantics = [#tpu.dimension_semantics<parallel>, #tpu.dimension_semantics<arbitrary>], iteration_bounds = array<i64: 2, 1>, scalar_prefetch = 0 : i64, scratch_operands = 0 : i64, tpu.core_type = #tpu.core_type<tc>, window_params = [{transform_indices = @transform_0, window_bounds = array<i64: 8, 256>}, {transform_indices = @transform_1, window_bounds = array<i64: 8, 128>}]} {
    %c0_i32 = arith.constant 0 : i32
    %0 = arith.cmpi eq, %arg1, %c0_i32 : i32
    %1 = arith.extui %0 : i1 to i32
    %c0_i32_0 = arith.constant 0 : i32
    %2 = arith.cmpi ne, %1, %c0_i32_0 : i32
    scf.if %2 {
      %cst = arith.constant 0.000000e+00 : f32
      %9 = vector.broadcast %cst : f32 to vector<8x128xf32>
      %c0_7 = arith.constant 0 : index
      %c0_8 = arith.constant 0 : index
      %10 = vector.load %arg3[%c0_7, %c0_8] : memref<8x128xf32, #tpu.memory_space<vmem>>, vector<8x128xf32>
      tpu.vector_store %arg3[%c0_7, %c0_8], %9 {strides = array<i32>} : memref<8x128xf32, #tpu.memory_space<vmem>>, vector<8x128xf32>,
    } else {
    }
    %c0 = arith.constant 0 : index
    %c0_1 = arith.constant 0 : index
    %3 = vector.load %arg2[%c0, %c0_1] : memref<8x256xf32, #tpu.memory_space<vmem>>, vector<8x128xf32>
    %c0_2 = arith.constant 0 : index
    %c128 = arith.constant 128 : index
    %4 = vector.load %arg2[%c0_2, %c128] : memref<8x256xf32, #tpu.memory_space<vmem>>, vector<8x128xf32>
    %5 = arith.addf %3, %4 : vector<8x128xf32>
    %c0_3 = arith.constant 0 : index
    %c0_4 = arith.constant 0 : index
    %6 = vector.load %arg3[%c0_3, %c0_4] : memref<8x128xf32, #tpu.memory_space<vmem>>, vector<8x128xf32>
    %7 = arith.addf %6, %5 : vector<8x128xf32>
    %c0_5 = arith.constant 0 : index
    %c0_6 = arith.constant 0 : index
    %8 = vector.load %arg3[%c0_5, %c0_6] : memref<8x128xf32, #tpu.memory_space<vmem>>, vector<8x128xf32>
    tpu.vector_store %arg3[%c0_5, %c0_6], %7 {strides = array<i32>} : memref<8x128xf32, #tpu.memory_space<vmem>>, vector<8x128xf32>,
    return
  }
  func.func @transform_0(%arg0: i32, %arg1: i32) -> (i32, i32) {
    %c0_i32 = arith.constant 0 : i32
    return %arg0, %arg1 : i32, i32
  }
  func.func @transform_1(%arg0: i32, %arg1: i32) -> (i32, i32) {
    %c0_i32 = arith.constant 0 : i32
    %c0_i32_0 = arith.constant 0 : i32
    return %arg0, %c0_i32 : i32, i32
  }
}

</mosaic_0001>

<llo_original>
// kernel: tpu_custom_call.1
$region0: #{tpu_custom_call.1}
  #allocation0 [shape = 'u32[]', space=smem, size = 0x4, offset = 0x4, fixed_abs, tag = 'smem constant byte address 0x4 - core index']
  #allocation1 [shape = 'u32[144,128]{1,0:T(1,128)}', space=vmem, size = 0x12000, scoped, tag = 'internal scratch']
  %s0 = inlined_call_operand.hbm [shape: f32[16,256], index: 0, kind: input, shape index: {}]
  %s1 = inlined_call_operand.hbm [shape: f32[16,128], index: 1, kind: output, shape index: {}]
  %s2 = sld [smem:[#allocation0]]
  $region45: #{tpu_custom_call.1} parent=0
    _
  %s4 = ssub.s32 1, %s2
  %s5 = scalar_select 0, %s4, %s2
  $region1: #{tpu_custom_call.1} parent=0
    #allocation2 [shape = 'u8[16384]{0}', space=vmem, size = 0x4000, scoped, tag = 'input window, operand 0']
    #allocation3 [shape = 's32[2]{0}', space=sflag, size = 0x8, scoped, tag = 'scoped memory for tpu_custom_call.1']
    #allocation4 [shape = 's32[2]{0}', space=sflag, size = 0x8, scoped, tag = 'scoped memory for tpu_custom_call.1']
    #allocation5 [shape = 'u8[8192]{0}', space=vmem, size = 0x2000, scoped, tag = 'output window, operand 0']
    %6 = vsyncpa [#allocation3], 0
    %s7 = scalar_lea.sflag [#allocation3], 1
    %8 = vsyncpa %s7, 0
    %9 = vsyncpa [#allocation4], 0
    %s10 = scalar_lea.sflag [#allocation4], 1
    %11 = vsyncpa %s10, 0
    loop: start=0, step=1, limit=4
    $region2: #{tpu_custom_call.1} parent=1 // loop_pre_header
      _
    $region3: #{tpu_custom_call.1} parent=1 // loop_header
      %s13 = sphi 0, %s17
      %p14 = scmp.ge.s32.totalorder %s13, 4
      %s20 = sphi 0, %s32
      %s21 = sphi 0, %s28
      %s22 = sphi 0, %s20
      %s23 = sphi 0, %s21
      %s24 = sphi 0, %s22
      %s25 = sphi 0, %s23
      %s37 = sphi 0, %s39
      %s40 = sphi 0, %s37
      %s41 = sphi 0, %s40
      %s57 = sphi 0, %s41
      %s63 = sphi 0, %s65
      %s66 = sphi 0, %s63
      %s67 = sphi 0, %s66
      %s83 = sphi 0, %s67
    $region4: #{tpu_custom_call.1} parent=1 // loop_header_branch
      %16 = sbr.rel (%p14) target = $region8
    $region5: #{tpu_custom_call.1} parent=1 // loop_body
      %s18 = ssub.s32 %s13, 1
      %s19 = ssub.s32 %s13, 2
      %s26 = sadd.s32 1, %s21
      %p27 = scmp.ge.s32.totalorder %s26, 1
      %s28 = scalar_select %p27, 0, %s26
      %s29 = sadd.s32 1, %s20
      %s30 = scalar_select %p27, %s29, %s20
      %p31 = scmp.ge.s32.totalorder %s30, 2
      %s32 = scalar_select %p31, 0, %s30
      %s33 = ssub.s32 %s20, %s32
      %s34 = ssub.s32 %s21, %s28
      %s35 = sor.u32 %s33, %s34
      %p36 = scmp.eq.s32.totalorder %s35, 0
      %s38 = sadd.s32 %s37, 1
      %s39 = scalar_select %p36, %s37, %s38
      %p42 = pneg %p36
      %p43 = scmp.eq.s32.totalorder %s13, 1
      %p44 = por %p42, %p43
      %p45 = scmp.ne.s32.totalorder %s37, %s40
      %p46 = scmp.eq.s32.totalorder %s13, 0
      %p47 = por %p45, %p46
      %p48 = scmp.ne.s32.totalorder %s37, %s40
      %p49 = scmp.eq.s32.totalorder %s18, 1
      %p50 = por %p48, %p49
      %p51 = scmp.ne.s32.totalorder %s40, %s41
      %p52 = scmp.eq.s32.totalorder %s18, 0
      %p53 = por %p51, %p52
      %p54 = scmp.ne.s32.totalorder %s40, %s41
      %p55 = scmp.eq.s32.totalorder %s19, 1
      %p56 = por %p54, %p55
      %p58 = scmp.ne.s32.totalorder %s41, %s57
      %p59 = scmp.eq.s32.totalorder %s19, 0
      %p60 = por %p58, %p59
      %s61 = ssub.s32 %s20, %s32
      %p62 = scmp.eq.s32.totalorder %s61, 0
      %s64 = sadd.s32 %s63, 1
      %s65 = scalar_select %p62, %s63, %s64
      %p68 = pneg %p62
      %p69 = scmp.eq.s32.totalorder %s13, 1
      %p70 = por %p68, %p69
      %p71 = scmp.ne.s32.totalorder %s63, %s66
      %p72 = scmp.eq.s32.totalorder %s13, 0
      %p73 = por %p71, %p72
      %p74 = scmp.ne.s32.totalorder %s63, %s66
      %p75 = scmp.eq.s32.totalorder %s18, 1
      %p76 = por %p74, %p75
      %p77 = scmp.ne.s32.totalorder %s66, %s67
      %p78 = scmp.eq.s32.totalorder %s18, 0
      %p79 = por %p77, %p78
      %p80 = scmp.ne.s32.totalorder %s66, %s67
      %p81 = scmp.eq.s32.totalorder %s19, 1
      %p82 = por %p80, %p81
      %p84 = scmp.ne.s32.totalorder %s67, %s83
      %p85 = scmp.eq.s32.totalorder %s19, 0
      %p86 = por %p84, %p85
      %p87 = scmp.le.s32.totalorder 1, %s13
      %p88 = scmp.lt.s32.totalorder %s13, 3
      %p89 = pnand %p87, %p88
      %p90 = pneg %p89
      // Predicated region
      $region9: #{tpu_custom_call.1} parent=5 // pred_check
        _
      $region10: #{tpu_custom_call.1} parent=5 // pred_check_branch
        %92 = sbr.rel (%p89) target = $region12
      $region11: #{tpu_custom_call.1} parent=5 // pred_region
        %s93 = ssub.s32 %s13, 1
      $region12: #{tpu_custom_call.1} parent=5 // pred_fallthru
        _
      %p94 = scmp.lt.s32.totalorder %s13, 2
      // Predicated region
      $region13: #{tpu_custom_call.1} parent=5 // pred_check
        %p95 = pneg %p94
      $region14: #{tpu_custom_call.1} parent=5 // pred_check_branch
        %97 = sbr.rel (%p95) target = $region16
      $region15: #{tpu_custom_call.1} parent=5 // pred_region
        // Predicated region
        $region17: #{tpu_custom_call.1} parent=15 // pred_check
          %p98 = pneg %p47
        $region18: #{tpu_custom_call.1} parent=15 // pred_check_branch
          %100 = sbr.rel (%p98) target = $region20
        $region19: #{tpu_custom_call.1} parent=15 // pred_region
          %s101 = sand.u32 %s37, 1
          %s102 = scalar_lea.sflag [#allocation3], %s101
          %s103 = sand.u32 %s37, 1
          %s104 = smul.addr %s103, 16
          %s105 = scalar_lea.vmem [#allocation2], %s104
          %s106 = smul.u32 2, %s21
          %s108 = ssub.s32 256, 256
          %109 = vsyncadd %s102, %s108
          %s110 = smul.addr %s20, 2
          %s111 = sadd.s32 %s106, %s110
          %s112 = smul.addr %s111, 128
          %s113 = scalar_lea.hbm %s0, %s112
          %s115 = sshll.u32 %s105, 4
          %s116 = int_to_ptr.vmem [resolvable:$true] %s115
          %118 = dma.hbm_to_vmem [thread:$0]  %s113, 256, %s116, %s102
        $region20: #{tpu_custom_call.1} parent=15 // pred_fallthru
          _
      $region16: #{tpu_custom_call.1} parent=5 // pred_fallthru
        _
      %p119 = scmp.le.s32.totalorder 1, %s13
      %p120 = scmp.lt.s32.totalorder %s13, 3
      %p121 = pnand %p119, %p120
      %p122 = pneg %p121
      // Predicated region
      $region21: #{tpu_custom_call.1} parent=5 // pred_check
        _
      $region22: #{tpu_custom_call.1} parent=5 // pred_check_branch
        %124 = sbr.rel (%p121) target = $region24
      $region23: #{tpu_custom_call.1} parent=5 // pred_region
        %s125 = ssub.s32 %s13, 1
        %s126 = sand.u32 %s40, 1
        %s127 = scalar_lea.sflag [#allocation3], %s126
        %s128 = sand.u32 %s40, 1
        %s129 = smul.addr %s128, 16
        %s130 = scalar_lea.vmem [#allocation2], %s129
        // Predicated region
        $region25: #{tpu_custom_call.1} parent=23 // pred_check
          %p131 = pneg %p53
        $region26: #{tpu_custom_call.1} parent=23 // pred_check_branch
          %133 = sbr.rel (%p131) target = $region28
        $region27: #{tpu_custom_call.1} parent=23 // pred_region
          %134 = dma.done %s127, 256
        $region28: #{tpu_custom_call.1} parent=23 // pred_fallthru
          _
        %s135 = sand.u32 %s40, 1
        %s136 = scalar_lea.sflag [#allocation3], %s135
        %s137 = sand.u32 %s40, 1
        %s138 = smul.addr %s137, 16
        %s139 = scalar_lea.vmem [#allocation2], %s138
        %p140 = pneg %p53
        %p141 = pneg %p50
        %p142 = pneg %p79
        %p143 = pneg %p76
        %s144 = sand.u32 %s66, 1
        %s145 = scalar_lea.sflag [#allocation4], %s144
        %s146 = sand.u32 %s66, 1
        %s147 = smul.addr %s146, 8
        %s148 = scalar_lea.vmem [#allocation5], %s147
        %s149 = smul.u32 2, %s23
        %p150 = scmp.eq.s32.totalorder %s23, 0
        // Predicated region
        $region29: #{tpu_custom_call.1} parent=23 // pred_check
          %p151 = pneg %p150
        $region30: #{tpu_custom_call.1} parent=23 // pred_check_branch
          %153 = sbr.rel (%p151) target = $region32
        $region31: #{tpu_custom_call.1} parent=23 // pred_region
          %154 = vst [vmem:[%s148] sm:$0xff] 0.0
        $region32: #{tpu_custom_call.1} parent=23 // pred_fallthru
          _
        %v155 = vld [vmem:[%s130] sm:$0xff]
        %v156 = vld [vmem:[%s130 + $0x8] sm:$0xff]
        %v157 = vadd.f32 %v155, %v156
        %v158 = vld [vmem:[%s148] sm:$0xff]
        %v159 = vadd.f32 %v158, %v157
        %160 = vst [vmem:[%s148] sm:$0xff] %v159
        %s161 = sand.u32 %s66, 1
        %s162 = scalar_lea.sflag [#allocation4], %s161
        %s163 = sand.u32 %s66, 1
        %s164 = smul.addr %s163, 8
        %s165 = scalar_lea.vmem [#allocation5], %s164
        // Predicated region
        $region33: #{tpu_custom_call.1} parent=23 // pred_check
          %p166 = pneg %p76
        $region34: #{tpu_custom_call.1} parent=23 // pred_check_branch
          %168 = sbr.rel (%p166) target = $region36
        $region35: #{tpu_custom_call.1} parent=23 // pred_region
          %s170 = ssub.s32 128, 128
          %171 = vsyncadd %s162, %s170
          %s172 = smul.addr %s22, 128
          %s173 = scalar_lea.hbm %s1, %s172
          %s175 = sshll.u32 %s165, 4
          %s176 = int_to_ptr.vmem [resolvable:$true] %s175
          %178 = dma.vmem_to_hbm [thread:$0]  %s176, 128, %s173, %s162
        $region36: #{tpu_custom_call.1} parent=23 // pred_fallthru
          _
      $region24: #{tpu_custom_call.1} parent=5 // pred_fallthru
        _
      %p179 = scmp.le.s32.totalorder 2, %s13
      // Predicated region
      $region37: #{tpu_custom_call.1} parent=5 // pred_check
        %p180 = pneg %p179
      $region38: #{tpu_custom_call.1} parent=5 // pred_check_branch
        %182 = sbr.rel (%p180) target = $region40
      $region39: #{tpu_custom_call.1} parent=5 // pred_region
        %s183 = ssub.s32 %s13, 2
        // Predicated region
        $region41: #{tpu_custom_call.1} parent=39 // pred_check
          %p184 = pneg %p82
        $region42: #{tpu_custom_call.1} parent=39 // pred_check_branch
          %186 = sbr.rel (%p184) target = $region44
        $region43: #{tpu_custom_call.1} parent=39 // pred_region
          %s187 = sand.u32 %s67, 1
          %s188 = scalar_lea.sflag [#allocation4], %s187
          %s189 = sand.u32 %s67, 1
          %s190 = smul.addr %s189, 8
          %s191 = scalar_lea.vmem [#allocation5], %s190
          %192 = dma.done %s188, 128
        $region44: #{tpu_custom_call.1} parent=39 // pred_fallthru
          _
      $region40: #{tpu_custom_call.1} parent=5 // pred_fallthru
        _
    $region6: #{tpu_custom_call.1} parent=1 // loop_footer
      %s17 = sadd.s32 1, %s13
    $region7: #{tpu_custom_call.1} parent=1 // loop_footer_branch
      %12 = sbr.rel target = $region3
    $region8: #{tpu_custom_call.1} parent=1 // loop_exit
      _
    %193 = vsyncpa [#allocation3], 1
    %s194 = scalar_lea.sflag [#allocation3], 1
    %195 = vsyncpa %s194, 1
    %196 = vsyncpa [#allocation4], 1
    %s197 = scalar_lea.sflag [#allocation4], 1
    %198 = vsyncpa %s197, 1

</llo_original>
